<compile_context>
chip_gen: v5e
topology: v5e:2x2
jax: 0.10.0
libtpu: 0.0.40
codegen_flags: <defaults>
</compile_context>

<pallas_src>
import functools

import jax
import jax.numpy as jnp
from jax import lax
from jax.experimental import pallas as pl
from jax.experimental.pallas import tpu as pltpu

_MIB = 1024 * 1024


def _round_up(x, m):
    return ((x + m - 1) // m) * m


def _cdiv(a, b):
    return (a + b - 1) // b


def _vmem_capacity_bytes():
    try:
        return int(pltpu.get_tpu_info().vmem_capacity_bytes)
    except Exception:
        return 64 * _MIB  # conservative fallback (v7x-sized VMEM)


# --------------------------------------------------------------------------
# Kernels
# --------------------------------------------------------------------------
def _ff_kernel_resident(q_ref, k_ref, v_ref, o_ref, *, compute_dtype):
    # q_ref: (TM, Dp)   row tile of flattened Q (already in compute dtype)
    # k_ref: (LKp, Dp)  full wi.weight, resident in VMEM (DMA'd once)
    # v_ref: (LKp, Dp)  full wo.weight.T, resident in VMEM (DMA'd once)
    # o_ref: (TM, Dp)   output tile
    s = lax.dot_general(q_ref[...], k_ref[...], (((1,), (1,)), ((), ())),
                        preferred_element_type=jnp.float32)
    a = jnp.maximum(s, 0.0).astype(compute_dtype)   # ReLU; dropout == identity (eval)
    o_ref[...] = lax.dot_general(a, v_ref[...], (((1,), (0,)), ((), ())),
                                 preferred_element_type=jnp.float32
                                 ).astype(o_ref.dtype)


def _ff_kernel_streaming(q_ref, k_ref, v_ref, o_ref, *scratch, compute_dtype,
                         single_k, acc_into_out):
    # q_ref: (TM, Dp)   row tile (resident across the L_K grid axis)
    # k_ref: (TK, Dp)   tile of wi.weight rows
    # v_ref: (TK, Dp)   tile of wo.weight.T rows
    # o_ref: (TM, Dp)   output tile (resident across the L_K grid axis)
    k_step = pl.program_id(1)

    s = lax.dot_general(q_ref[...], k_ref[...], (((1,), (1,)), ((), ())),
                        preferred_element_type=jnp.float32)
    a = jnp.maximum(s, 0.0).astype(compute_dtype)
    partial = lax.dot_general(a, v_ref[...], (((1,), (0,)), ((), ())),
                              preferred_element_type=jnp.float32)

    if single_k:
        o_ref[...] = partial.astype(o_ref.dtype)
    elif acc_into_out:
        # f32 output: accumulate directly into the resident output block.
        @pl.when(k_step == 0)
        def _():
            o_ref[...] = partial

        @pl.when(k_step > 0)
        def _():
            o_ref[...] = o_ref[...] + partial
    else:
        acc_ref = scratch[0]

        @pl.when(k_step == 0)
        def _():
            acc_ref[...] = jnp.zeros_like(acc_ref)

        acc_ref[...] += partial

        @pl.when(k_step == pl.num_programs(1) - 1)
        def _():
            o_ref[...] = acc_ref[...].astype(o_ref.dtype)


# --------------------------------------------------------------------------
# Wrapper
# --------------------------------------------------------------------------
def ff_block(Q, wi_weight, wo_weight, *, tile_m_max=512, tile_k_max=512,
             compute_dtype=None, vmem_limit_bytes=None):
    """Pallas FFBlock forward.

    Q:         (..., d)
    wi_weight: (L_K, d)   -- nn.Linear(d, L_K, bias=False).weight
    wo_weight: (d, L_K)   -- nn.Linear(L_K, d, bias=False).weight
    compute_dtype: MXU operand dtype.  Default (None): bf16 when Q is f32,
                   else Q.dtype.  Accumulation is always f32.  Pass
                   jnp.float32 for exact f32 math.
    """
    in_shape = Q.shape
    d = in_shape[-1]
    L_K = wi_weight.shape[0]
    assert wi_weight.shape == (L_K, d)
    assert wo_weight.shape == (d, L_K)

    out_dtype = Q.dtype
    if compute_dtype is None:
        compute_dtype = jnp.bfloat16 if Q.dtype == jnp.float32 else Q.dtype
    compute_dtype = jnp.dtype(compute_dtype)

    # Wrapper-side cast (halves DMA bytes for all three streamed operands) and
    # one-time transpose of wo to V=(L_K, d) so both matmuls feed the MXU in
    # canonical, lane-dense layouts (no in-kernel transpose of weights).
    q_flat = Q.reshape(-1, d).astype(compute_dtype)
    wi = wi_weight.astype(compute_dtype)
    v = wo_weight.T.astype(compute_dtype)

    n = q_flat.shape[0]
    dp = _round_up(d, 128)                       # lane-dense hidden dim
    c_bytes = compute_dtype.itemsize
    o_bytes = jnp.dtype(out_dtype).itemsize
    row_align = 16 if c_bytes < 4 else 8         # sublane packing of compute dtype

    # Generation-aware VMEM budget (v5e/v6e: 128 MiB, v7x: 64 MiB).
    cap = _vmem_capacity_bytes()
    if cap >= 96 * _MIB:
        budget = 88 * _MIB
        default_limit = 100 * _MIB
    else:
        budget = 28 * _MIB
        default_limit = 48 * _MIB
    if vmem_limit_bytes is None:
        vmem_limit_bytes = default_limit

    n_aligned = max(row_align, _round_up(n, row_align))
    lkp_full = _round_up(L_K, 128)
    tile_m = min(_round_up(tile_m_max, row_align), n_aligned)

    # ---------------- weights-resident fast path feasibility ----------------
    def vmem_resident(tm):
        return (2 * tm * dp * c_bytes            # Q blocks (double-buffered)
                + 2 * lkp_full * dp * c_bytes    # wi (full)
                + 2 * lkp_full * dp * c_bytes    # V  (full)
                + 2 * tm * dp * o_bytes          # out blocks
                + tm * lkp_full * 4              # scores temporary (f32)
                + tm * lkp_full * c_bytes)       # ReLU/cast temporary

    tm_floor_res = min(max(256, row_align), n_aligned)
    tm_res = tile_m
    while vmem_resident(tm_res) > budget and tm_res > tm_floor_res:
        tm_res = max(tm_floor_res, _round_up(tm_res // 2, row_align))
    use_resident = vmem_resident(tm_res) <= budget

    if use_resident:
        tile_m = tm_res
        lkp = lkp_full
        tile_k = lkp
    else:
        # ---------------- streaming path: pick (tile_m, tile_k) -------------
        tile_k = min(_round_up(tile_k_max, 128), lkp_full)

        def vmem_streaming(tm, tk):
            acc_bytes = 0 if jnp.dtype(out_dtype) == jnp.float32 else tm * dp * 4
            return (2 * tm * dp * c_bytes        # Q blocks
                    + 2 * tk * dp * c_bytes      # wi blocks
                    + 2 * tk * dp * c_bytes      # V blocks
                    + 2 * tm * dp * o_bytes      # out blocks
                    + acc_bytes                  # f32 accumulator scratch
                    + tm * tk * 4                # scores temporary (f32)
                    + tm * tk * c_bytes)         # ReLU/cast temporary

        def fits(tm, tk):
            return vmem_streaming(tm, tk) <= budget

        # Shrink tile_k first (keeps total weight traffic constant), then
        # tile_m (multiplies weight re-streaming), with sensible floors.
        while not fits(tile_m, tile_k) and tile_k > 256:
            tile_k = max(256, _round_up(tile_k // 2, 128))
        while not fits(tile_m, tile_k) and tile_m > 256:
            tile_m = max(256, _round_up(tile_m // 2, row_align))
        while not fits(tile_m, tile_k) and tile_k > 128:
            tile_k = max(128, _round_up(tile_k // 2, 128))
        while not fits(tile_m, tile_k) and tile_m > row_align:
            tile_m = max(row_align, _round_up(tile_m // 2, row_align))
        lkp = _round_up(L_K, tile_k)

    # Give the "parallel" row axis >= 2 tiles when there is enough work so
    # both v7x TensorCores get a share (harmless elsewhere: ~0.35 us/step).
    if n_aligned >= 256 and _cdiv(n_aligned, tile_m) < 2:
        tile_m = max(row_align, _round_up(_cdiv(n_aligned, 2), row_align))

    np_rows = _round_up(n, tile_m)

    # Zero padding is exact: padded d columns / L_K rows contribute nothing to
    # relu(Q K^T) @ V, and padded output rows/cols are sliced off.
    if (np_rows, dp) != (n, d):
        q_flat = jnp.pad(q_flat, ((0, np_rows - n), (0, dp - d)))
    if (lkp, dp) != (L_K, d):
        wi = jnp.pad(wi, ((0, lkp - L_K), (0, dp - d)))
        v = jnp.pad(v, ((0, lkp - L_K), (0, dp - d)))

    if use_resident:
        grid = (np_rows // tile_m,)
        kernel = functools.partial(_ff_kernel_resident,
                                   compute_dtype=compute_dtype)
        out = pl.pallas_call(
            kernel,
            out_shape=jax.ShapeDtypeStruct((np_rows, dp), out_dtype),
            grid_spec=pltpu.PrefetchScalarGridSpec(
                num_scalar_prefetch=0,
                grid=grid,
                in_specs=[
                    pl.BlockSpec((tile_m, dp), lambda i: (i, 0)),  # Q rows
                    pl.BlockSpec((lkp, dp), lambda i: (0, 0)),     # wi, DMA'd once
                    pl.BlockSpec((lkp, dp), lambda i: (0, 0)),     # V,  DMA'd once
                ],
                out_specs=pl.BlockSpec((tile_m, dp), lambda i: (i, 0)),
            ),
            compiler_params=pltpu.CompilerParams(
                dimension_semantics=("parallel",),
                vmem_limit_bytes=vmem_limit_bytes,
            ),
        )(q_flat, wi, v)
    else:
        grid = (np_rows // tile_m, lkp // tile_k)
        single_k = grid[1] == 1
        acc_into_out = jnp.dtype(out_dtype) == jnp.float32
        scratch_shapes = []
        if not single_k and not acc_into_out:
            scratch_shapes = [pltpu.VMEM((tile_m, dp), jnp.float32)]
        kernel = functools.partial(_ff_kernel_streaming,
                                   compute_dtype=compute_dtype,
                                   single_k=single_k,
                                   acc_into_out=acc_into_out)
        out = pl.pallas_call(
            kernel,
            out_shape=jax.ShapeDtypeStruct((np_rows, dp), out_dtype),
            grid_spec=pltpu.PrefetchScalarGridSpec(
                num_scalar_prefetch=0,
                grid=grid,
                in_specs=[
                    pl.BlockSpec((tile_m, dp), lambda i, k: (i, 0)),  # Q rows
                    pl.BlockSpec((tile_k, dp), lambda i, k: (k, 0)),  # wi rows
                    pl.BlockSpec((tile_k, dp), lambda i, k: (k, 0)),  # V rows
                ],
                out_specs=pl.BlockSpec((tile_m, dp), lambda i, k: (i, 0)),
                scratch_shapes=scratch_shapes,
            ),
            compiler_params=pltpu.CompilerParams(
                dimension_semantics=("parallel", "arbitrary"),
                vmem_limit_bytes=vmem_limit_bytes,
            ),
        )(q_flat, wi, v)

    if (np_rows, dp) != (n, d):
        out = out[:n, :d]
    return out.reshape(in_shape)


def ff_block_ref(Q, wi_weight, wo_weight):
    """Pure-JAX reference matching the PyTorch module (eval mode)."""
    in_shape = Q.shape
    q = Q.reshape(-1, in_shape[-1])
    s = q @ wi_weight.T
    a = jnp.maximum(s, 0.0)
    out = a @ wo_weight.T
    return out.reshape(in_shape)


if __name__ == "__main__":
    key = jax.random.PRNGKey(0)
    k_q, k_wi, k_wo = jax.random.split(key, 3)

    # Small shapes implied by the module: Q is (batch, seq, d); hidden L_K.
    batch, seq, d, L_K = 2, 8, 32, 64

    Q = jax.random.normal(k_q, (batch, seq, d), dtype=jnp.float32)
    # Deterministic synthetic "Linear" weights (uniform, like PyTorch init).
    bound_i = 1.0 / (d ** 0.5)
    bound_o = 1.0 / (L_K ** 0.5)
    wi_weight = jax.random.uniform(k_wi, (L_K, d), jnp.float32,
                                   minval=-bound_i, maxval=bound_i)
    wo_weight = jax.random.uniform(k_wo, (d, L_K), jnp.float32,
                                   minval=-bound_o, maxval=bound_o)

    ref = ff_block_ref(Q, wi_weight, wo_weight)

    # Exact f32 path (opt-in).
    out_f32 = jax.block_until_ready(
        ff_block(Q, wi_weight, wo_weight, compute_dtype=jnp.float32))
    assert out_f32.shape == Q.shape
    assert jnp.allclose(out_f32, ref, atol=1e-5, rtol=1e-5), "mismatch vs reference"

    # Default path: bf16 MXU operands / f32 accumulation (coarse sanity check).
    out_def = jax.block_until_ready(ff_block(Q, wi_weight, wo_weight))
    assert out_def.shape == Q.shape
    assert float(jnp.max(jnp.abs(out_def - ref))) < 0.1, "bf16 path diverged"

    print("KERNEL_OK")
</pallas_src>

<mosaic_0001>
module attributes {stable_mosaic.version = 11 : i64} {
  func.func @_ff_kernel_resident(%arg0: i32, %arg1: memref<16x128xf32, #tpu.memory_space<vmem>>, %arg2: memref<128x128xf32, #tpu.memory_space<vmem>>, %arg3: memref<128x128xf32, #tpu.memory_space<vmem>>, %arg4: memref<16x128xf32, #tpu.memory_space<vmem>>) attributes {dimension_semantics = [#tpu.dimension_semantics<parallel>], iteration_bounds = array<i64: 1>, scalar_prefetch = 0 : i64, scratch_operands = 0 : i64, tpu.core_type = #tpu.core_type<tc>, window_params = [{transform_indices = @transform_0, window_bounds = array<i64: 16, 128>}, {pipeline_mode = #tpu.pipeline_mode<synchronous>, transform_indices = @transform_1, window_bounds = array<i64: 128, 128>}, {pipeline_mode = #tpu.pipeline_mode<synchronous>, transform_indices = @transform_2, window_bounds = array<i64: 128, 128>}, {transform_indices = @transform_3, window_bounds = array<i64: 16, 128>}]} {
    %c0 = arith.constant 0 : index
    %c0_0 = arith.constant 0 : index
    %0 = vector.load %arg1[%c0, %c0_0] : memref<16x128xf32, #tpu.memory_space<vmem>>, vector<16x128xf32>
    %c0_1 = arith.constant 0 : index
    %c0_2 = arith.constant 0 : index
    %1 = vector.load %arg2[%c0_1, %c0_2] : memref<128x128xf32, #tpu.memory_space<vmem>>, vector<128x128xf32>
    %cst = arith.constant dense<0.000000e+00> : vector<16x128xf32>
    %2 = tpu.matmul %0, %1, %cst {dimension_numbers = #tpu.dot_dimension_numbers<[1], [1], [0], [0], [0, 0, 1, 0], [], []>} : vector<16x128xf32>, vector<128x128xf32>, vector<16x128xf32> -> vector<16x128xf32>
    %cst_3 = arith.constant 0.000000e+00 : f32
    %3 = vector.broadcast %cst_3 : f32 to vector<16x128xf32>
    %4 = arith.maximumf %2, %3 : vector<16x128xf32>
    %c0_4 = arith.constant 0 : index
    %c0_5 = arith.constant 0 : index
    %5 = vector.load %arg3[%c0_4, %c0_5] : memref<128x128xf32, #tpu.memory_space<vmem>>, vector<128x128xf32>
    %cst_6 = arith.constant dense<0.000000e+00> : vector<16x128xf32>
    %6 = tpu.matmul %4, %5, %cst_6 {dimension_numbers = #tpu.dot_dimension_numbers<[1], [0], [0], [1], [0, 0, 1, 1], [], []>} : vector<16x128xf32>, vector<128x128xf32>, vector<16x128xf32> -> vector<16x128xf32>
    %c0_7 = arith.constant 0 : index
    %c0_8 = arith.constant 0 : index
    %7 = vector.load %arg4[%c0_7, %c0_8] : memref<16x128xf32, #tpu.memory_space<vmem>>, vector<16x128xf32>
    tpu.vector_store %arg4[%c0_7, %c0_8], %6 {strides = array<i32>} : memref<16x128xf32, #tpu.memory_space<vmem>>, vector<16x128xf32>,
    return
  }
  func.func @transform_0(%arg0: i32) -> (i32, i32) {
    %c0_i32 = arith.constant 0 : i32
    %c0_i32_0 = arith.constant 0 : i32
    return %arg0, %c0_i32 : i32, i32
  }
  func.func @transform_1(%arg0: i32) -> (i32, i32) {
    %c0_i32 = arith.constant 0 : i32
    %c0_i32_0 = arith.constant 0 : i32
    %c0_i32_1 = arith.constant 0 : i32
    return %c0_i32, %c0_i32_0 : i32, i32
  }
  func.func @transform_2(%arg0: i32) -> (i32, i32) {
    %c0_i32 = arith.constant 0 : i32
    %c0_i32_0 = arith.constant 0 : i32
    %c0_i32_1 = arith.constant 0 : i32
    return %c0_i32, %c0_i32_0 : i32, i32
  }
  func.func @transform_3(%arg0: i32) -> (i32, i32) {
    %c0_i32 = arith.constant 0 : i32
    %c0_i32_0 = arith.constant 0 : i32
    return %arg0, %c0_i32 : i32, i32
  }
}

</mosaic_0001>

<llo_original>
// kernel: tpu_custom_call.1
$region0: #{tpu_custom_call.1}
  #allocation0 [shape = 'u32[]', space=smem, size = 0x4, offset = 0x4, fixed_abs, tag = 'smem constant byte address 0x4 - core index']
  #allocation1 [shape = 'u32[72,128]{1,0:T(1,128)}', space=vmem, size = 0x9000, scoped, tag = 'internal scratch']
  %s0 = inlined_call_operand.hbm [shape: f32[16,128], index: 0, kind: input, shape index: {}]
  %s1 = inlined_call_operand.hbm [shape: f32[128,128], index: 1, kind: input, shape index: {}]
  %s2 = inlined_call_operand.hbm [shape: f32[128,128], index: 2, kind: input, shape index: {}]
  %s3 = inlined_call_operand.hbm [shape: f32[16,128], index: 3, kind: output, shape index: {}]
  %s4 = sld [smem:[#allocation0]]
  $region34: #{tpu_custom_call.1} parent=0
    _
  %s6 = ssub.s32 1, %s4
  %s7 = scalar_select 0, %s6, %s4
  $region1: #{tpu_custom_call.1} parent=0
    #allocation2 [shape = 'u8[8192]{0}', space=vmem, size = 0x2000, scoped, tag = 'input window, operand 0, single buffered']
    #allocation3 [shape = 's32[1]{0}', space=sflag, size = 0x4, scoped, tag = 'scoped memory for tpu_custom_call.1']
    #allocation4 [shape = 's32[1]{0}', space=sflag, size = 0x4, scoped, tag = 'scoped memory for tpu_custom_call.1']
    #allocation5 [shape = 'u8[65536]{0}', space=vmem, size = 0x10000, scoped, tag = 'input window, operand 1, single buffered']
    #allocation6 [shape = 's32[1]{0}', space=sflag, size = 0x4, scoped, tag = 'scoped memory for tpu_custom_call.1']
    #allocation7 [shape = 'u8[65536]{0}', space=vmem, size = 0x10000, scoped, tag = 'input window, operand 2, single buffered']
    #allocation8 [shape = 'u8[8192]{0}', space=vmem, size = 0x2000, scoped, tag = 'output window, operand 0, single buffered']
    %8 = vsyncpa [#allocation3], 0
    %9 = vsyncpa [#allocation6], 0
    %10 = vsyncpa [#allocation4], 0
    // Predicated region
    $region2: #{tpu_custom_call.1} parent=1 // pred_check
      _
    $region3: #{tpu_custom_call.1} parent=1 // pred_check_branch
      %12 = sbr.rel (0) target = $region5
    $region4: #{tpu_custom_call.1} parent=1 // pred_region
      %14 = vsyncadd [#allocation3], 0
      %s15 = sshll.u32 %s0, 4
      %s16 = int_to_ptr.hbm [resolvable:$true] %s15
      %s17 = sshll.u32 [#allocation2], 4
      %s18 = int_to_ptr.vmem [resolvable:$true] %s17
      %23 = dma.hbm_to_vmem [thread:$0]  %s16, 256, %s18, [#allocation3], 128, 128, 8
    $region5: #{tpu_custom_call.1} parent=1 // pred_fallthru
      _
    // Predicated region
    $region6: #{tpu_custom_call.1} parent=1 // pred_check
      _
    $region7: #{tpu_custom_call.1} parent=1 // pred_check_branch
      %25 = sbr.rel (0) target = $region9
    $region8: #{tpu_custom_call.1} parent=1 // pred_region
      %27 = vsyncadd [#allocation6], 0
      %s28 = sshll.u32 %s1, 4
      %s29 = int_to_ptr.hbm [resolvable:$true] %s28
      %s30 = sshll.u32 [#allocation5], 4
      %s31 = int_to_ptr.vmem [resolvable:$true] %s30
      %36 = dma.hbm_to_vmem [thread:$0]  %s29, 2048, %s31, [#allocation6], 128, 128, 8
    $region9: #{tpu_custom_call.1} parent=1 // pred_fallthru
      _
    // Predicated region
    $region10: #{tpu_custom_call.1} parent=1 // pred_check
      _
    $region11: #{tpu_custom_call.1} parent=1 // pred_check_branch
      %38 = sbr.rel (0) target = $region13
    $region12: #{tpu_custom_call.1} parent=1 // pred_region
      %40 = vsyncadd [#allocation6], 0
      %s41 = sshll.u32 %s2, 4
      %s42 = int_to_ptr.hbm [resolvable:$true] %s41
      %s43 = sshll.u32 [#allocation7], 4
      %s44 = int_to_ptr.vmem [resolvable:$true] %s43
      %49 = dma.hbm_to_vmem [thread:$0]  %s42, 2048, %s44, [#allocation6], 128, 128, 8
    $region13: #{tpu_custom_call.1} parent=1 // pred_fallthru
      _
    // Predicated region
    $region14: #{tpu_custom_call.1} parent=1 // pred_check
      _
    $region15: #{tpu_custom_call.1} parent=1 // pred_check_branch
      %51 = sbr.rel (0) target = $region17
    $region16: #{tpu_custom_call.1} parent=1 // pred_region
      %53 = dma.done [#allocation3], 256
    $region17: #{tpu_custom_call.1} parent=1 // pred_fallthru
      _
    // Predicated region
    $region18: #{tpu_custom_call.1} parent=1 // pred_check
      _
    $region19: #{tpu_custom_call.1} parent=1 // pred_check_branch
      %55 = sbr.rel (0) target = $region21
    $region20: #{tpu_custom_call.1} parent=1 // pred_region
      %57 = dma.done [#allocation6], 2048
    $region21: #{tpu_custom_call.1} parent=1 // pred_fallthru
      _
    // Predicated region
    $region22: #{tpu_custom_call.1} parent=1 // pred_check
      _
    $region23: #{tpu_custom_call.1} parent=1 // pred_check_branch
      %59 = sbr.rel (0) target = $region25
    $region24: #{tpu_custom_call.1} parent=1 // pred_region
      %61 = dma.done [#allocation6], 2048
    $region25: #{tpu_custom_call.1} parent=1 // pred_fallthru
      _
    %v62 = vld [vmem:[#allocation2] sm:$0xff]
    %v63 = vld [vmem:[#allocation2 + $0x8] sm:$0xff]
    %v64 = vld [vmem:[#allocation5] sm:$0xff]
    %v65 = vld [vmem:[#allocation5 + $0x8] sm:$0xff]
    %v66 = vld [vmem:[#allocation5 + $0x10] sm:$0xff]
    %v67 = vld [vmem:[#allocation5 + $0x18] sm:$0xff]
    %v68 = vld [vmem:[#allocation5 + $0x20] sm:$0xff]
    %v69 = vld [vmem:[#allocation5 + $0x28] sm:$0xff]
    %v70 = vld [vmem:[#allocation5 + $0x30] sm:$0xff]
    %v71 = vld [vmem:[#allocation5 + $0x38] sm:$0xff]
    %v72 = vld [vmem:[#allocation5 + $0x40] sm:$0xff]
    %v73 = vld [vmem:[#allocation5 + $0x48] sm:$0xff]
    %v74 = vld [vmem:[#allocation5 + $0x50] sm:$0xff]
    %v75 = vld [vmem:[#allocation5 + $0x58] sm:$0xff]
    %v76 = vld [vmem:[#allocation5 + $0x60] sm:$0xff]
    %v77 = vld [vmem:[#allocation5 + $0x68] sm:$0xff]
    %v78 = vld [vmem:[#allocation5 + $0x70] sm:$0xff]
    %v79 = vld [vmem:[#allocation5 + $0x78] sm:$0xff]
    %80 = vmatpush.xpose.msra.mxu0 %v79
    %81 = vmatpush.xpose.msra.mxu0 %v78
    %82 = vmatpush.xpose.msra.mxu0 %v77
    %83 = vmatpush.xpose.msra.mxu0 %v76
    %84 = vmatpush.xpose.msra.mxu0 %v75
    %85 = vmatpush.xpose.msra.mxu0 %v74
    %86 = vmatpush.xpose.msra.mxu0 %v73
    %87 = vmatpush.xpose.msra.mxu0 %v72
    %88 = vmatpush.xpose.msra.mxu0 %v71
    %89 = vmatpush.xpose.msra.mxu0 %v70
    %90 = vmatpush.xpose.msra.mxu0 %v69
    %91 = vmatpush.xpose.msra.mxu0 %v68
    %92 = vmatpush.xpose.msra.mxu0 %v67
    %93 = vmatpush.xpose.msra.mxu0 %v66
    %94 = vmatpush.xpose.msra.mxu0 %v65
    %95 = vmatpush.xpose.msra.mxu0 %v64
    %96 = vmatmul.f32.gmra.mxu0 %v62
    %v97 = vpop.f32.mrf.mxu0
    %v98 = vadd.f32 0.0, %v97
    %99 = vmatmul.f32.gmra.mxu0 %v63
    %v100 = vpop.f32.mrf.mxu0
    %v101 = vadd.f32 0.0, %v100
    %102 = vdwg.mxu0
    %v103 = vmax.f32 %v98, 0.0
    %v104 = vmax.f32 %v101, 0.0
    %v105 = vld [vmem:[#allocation7] sm:$0xff]
    %v106 = vld [vmem:[#allocation7 + $0x8] sm:$0xff]
    %v107 = vld [vmem:[#allocation7 + $0x10] sm:$0xff]
    %v108 = vld [vmem:[#allocation7 + $0x18] sm:$0xff]
    %v109 = vld [vmem:[#allocation7 + $0x20] sm:$0xff]
    %v110 = vld [vmem:[#allocation7 + $0x28] sm:$0xff]
    %v111 = vld [vmem:[#allocation7 + $0x30] sm:$0xff]
    %v112 = vld [vmem:[#allocation7 + $0x38] sm:$0xff]
    %v113 = vld [vmem:[#allocation7 + $0x40] sm:$0xff]
    %v114 = vld [vmem:[#allocation7 + $0x48] sm:$0xff]
    %v115 = vld [vmem:[#allocation7 + $0x50] sm:$0xff]
    %v116 = vld [vmem:[#allocation7 + $0x58] sm:$0xff]
    %v117 = vld [vmem:[#allocation7 + $0x60] sm:$0xff]
    %v118 = vld [vmem:[#allocation7 + $0x68] sm:$0xff]
    %v119 = vld [vmem:[#allocation7 + $0x70] sm:$0xff]
    %v120 = vld [vmem:[#allocation7 + $0x78] sm:$0xff]
    %121 = vmatpush.msra.mxu0 %v120
    %122 = vmatpush.msra.mxu0 %v119
    %123 = vmatpush.msra.mxu0 %v118
    %124 = vmatpush.msra.mxu0 %v117
    %125 = vmatpush.msra.mxu0 %v116
    %126 = vmatpush.msra.mxu0 %v115
    %127 = vmatpush.msra.mxu0 %v114
    %128 = vmatpush.msra.mxu0 %v113
    %129 = vmatpush.msra.mxu0 %v112
    %130 = vmatpush.msra.mxu0 %v111
    %131 = vmatpush.msra.mxu0 %v110
    %132 = vmatpush.msra.mxu0 %v109
    %133 = vmatpush.msra.mxu0 %v108
    %134 = vmatpush.msra.mxu0 %v107
    %135 = vmatpush.msra.mxu0 %v106
    %136 = vmatpush.msra.mxu0 %v105
    %137 = vmatmul.f32.gmra.mxu0 %v103
    %v138 = vpop.f32.mrf.mxu0
    %v139 = vadd.f32 0.0, %v138
    %140 = vmatmul.f32.gmra.mxu0 %v104
    %v141 = vpop.f32.mrf.mxu0
    %v142 = vadd.f32 0.0, %v141
    %143 = vdwg.mxu0
    %144 = vst [vmem:[#allocation8] sm:$0xff] %v139
    %145 = vst [vmem:[#allocation8 + $0x8] sm:$0xff] %v142
    // Predicated region
    $region26: #{tpu_custom_call.1} parent=1 // pred_check
      _
    $region27: #{tpu_custom_call.1} parent=1 // pred_check_branch
      %147 = sbr.rel (0) target = $region29
    $region28: #{tpu_custom_call.1} parent=1 // pred_region
      %149 = vsyncadd [#allocation4], 0
      %s150 = sshll.u32 [#allocation8], 4
      %s151 = int_to_ptr.vmem [resolvable:$true] %s150
      %s152 = sshll.u32 %s3, 4
      %s153 = int_to_ptr.hbm [resolvable:$true] %s152
      %158 = dma.vmem_to_hbm [thread:$0]  %s151, 256, %s153, [#allocation4], 128, 128, 8
    $region29: #{tpu_custom_call.1} parent=1 // pred_fallthru
      _
    // Predicated region
    $region30: #{tpu_custom_call.1} parent=1 // pred_check
      _
    $region31: #{tpu_custom_call.1} parent=1 // pred_check_branch
      %160 = sbr.rel (0) target = $region33
    $region32: #{tpu_custom_call.1} parent=1 // pred_region
      %162 = dma.done [#allocation4], 256
    $region33: #{tpu_custom_call.1} parent=1 // pred_fallthru
      _
    %163 = vsyncpa [#allocation3], 1
    %164 = vsyncpa [#allocation6], 1
    %165 = vsyncpa [#allocation4], 1

</llo_original>
